<compile_context>
chip_gen: v5e
topology: v5e:2x2
jax: 0.10.0
libtpu: 0.0.40
codegen_flags: <defaults>
</compile_context>

<pallas_src>
import jax
import jax.numpy as jnp
from jax.experimental import pallas as pl
from jax.experimental.pallas import tpu as pltpu

# --- sizes (consistent with the module's constructor args) ---
B = 2                    # batch (example)
C_IMG, H, W = 4, 16, 16
T_IN = 32                # raw text feature dim fed to language_module
V_IN = C_IMG * H * W     # flattened image dim fed to vision_module
LANG_DIM = 32            # language_feature_dim
VIS_DIM = 32             # vision_feature_dim
FUSION = 64              # fusion_output_size
NUM_CLASSES = 8
DROPOUT_P = 0.1          # eval-mode dropout -> identity

CLS_PAD = 128            # lane-dense classifier width inside the kernel (>= NUM_CLASSES)
MAX_TILE_B = 512         # batch rows per grid step cap (fits default scoped VMEM everywhere)
_NEG = -1e30             # padded-class bias (f32!) -> exp() underflows to exactly 0


def _fusion_kernel(text_ref, img_ref,
                   wl_ref, bl_ref,
                   wv_ref, bv_ref,
                   wf_l_ref, wf_v_ref, bf_ref,
                   wc_ref, bc_ref,
                   pred_ref):
    # language branch: relu(text @ Wl + bl); f32 tile cast to bf16 right before the MXU.
    text_feat = jnp.maximum(
        jnp.dot(text_ref[...].astype(jnp.bfloat16), wl_ref[...],
                preferred_element_type=jnp.float32)
        + bl_ref[...], 0.0)
    # vision branch: relu(image_flat @ Wv + bv)
    img_feat = jnp.maximum(
        jnp.dot(img_ref[...].astype(jnp.bfloat16), wv_ref[...],
                preferred_element_type=jnp.float32)
        + bv_ref[...], 0.0)
    # fusion Linear over concat([text_feat, img_feat]) == split-weight matmuls (no concat)
    fused = jnp.maximum(
        jnp.dot(text_feat.astype(jnp.bfloat16), wf_l_ref[...],
                preferred_element_type=jnp.float32)
        + jnp.dot(img_feat.astype(jnp.bfloat16), wf_v_ref[...],
                  preferred_element_type=jnp.float32)
        + bf_ref[...], 0.0)
    # dropout: identity (eval mode)
    # classifier at lane-dense width CLS_PAD; padded columns carry -1e30 f32 bias -> exp == 0
    logits = (jnp.dot(fused.astype(jnp.bfloat16), wc_ref[...],
                      preferred_element_type=jnp.float32)
              + bc_ref[...])
    # numerically-stable softmax over classes (dim=1); padded lanes contribute 0 mass
    m = jnp.max(logits, axis=-1, keepdims=True)
    e = jnp.exp(logits - m)
    denom = jnp.sum(e, axis=-1, keepdims=True)
    probs = e * pl.reciprocal(denom, approx=True)
    # store only the real classes: narrow f32 writeback (32 B/row instead of 512 B/row)
    pred_ref[...] = probs[:, :NUM_CLASSES]


def prepare_params(params):
    """One-time prep: split/pad/reshape/cast so the steady-state call does no HBM glue."""
    wl = params["wl"].astype(jnp.bfloat16)
    wv = params["wv"].astype(jnp.bfloat16)
    wf = params["wf"]
    wf_l = wf[:LANG_DIM, :].astype(jnp.bfloat16)   # fusion weight split == concat order
    wf_v = wf[LANG_DIM:, :].astype(jnp.bfloat16)
    # lane-dense padded classifier: zero weight columns, -1e30 f32 bias in padded slots
    wc_pad = jnp.zeros((FUSION, CLS_PAD), jnp.float32)
    wc_pad = wc_pad.at[:, :NUM_CLASSES].set(params["wc"]).astype(jnp.bfloat16)
    bc_pad = jnp.full((1, CLS_PAD), _NEG, jnp.float32)
    bc_pad = bc_pad.at[0, :NUM_CLASSES].set(params["bc"])
    return (wl, params["bl"].reshape(1, -1).astype(jnp.float32),
            wv, params["bv"].reshape(1, -1).astype(jnp.float32),
            wf_l, wf_v, params["bf"].reshape(1, -1).astype(jnp.float32),
            wc_pad, bc_pad)


def _round_up(x, m):
    return ((x + m - 1) // m) * m


def _choose_tile_b(b_in):
    # Tiny B: pad only to a 16-row sublane multiple (vs 128 before -> ~8x less padding work).
    # Large B: up to 512-row tiles (~85% of HBM roofline in the measured tile sweep).
    # cdiv(b_in, 2) keeps >=2 grid steps whenever possible so both v7x TensorCores are used
    # via dimension_semantics=("parallel",).
    return min(MAX_TILE_B, _round_up(pl.cdiv(b_in, 2), 16))


@jax.jit
def language_and_vision_concat(text, image, prepared):
    """text: (B, T_IN) f32, image: (B, C, H, W) NCHW f32. Returns (pred, loss=None)."""
    wl, bl, wv, bv, wf_l, wf_v, bf, wc_pad, bc_pad = prepared

    b_in = text.shape[0]
    img_flat = image.reshape(b_in, -1)            # NCHW row-major flatten (free, no copy pass)

    tile_b = _choose_tile_b(b_in)
    n_tiles = pl.cdiv(b_in, tile_b)               # ragged last tile handled by Pallas masking

    full = lambda i: (0, 0)   # weights/biases: grid-invariant, resident across the batch grid
    in_specs = [
        pl.BlockSpec((tile_b, T_IN), lambda i: (i, 0)),
        pl.BlockSpec((tile_b, V_IN), lambda i: (i, 0)),
        pl.BlockSpec((T_IN, LANG_DIM), full),
        pl.BlockSpec((1, LANG_DIM), full),
        pl.BlockSpec((V_IN, VIS_DIM), full),
        pl.BlockSpec((1, VIS_DIM), full),
        pl.BlockSpec((LANG_DIM, FUSION), full),
        pl.BlockSpec((VIS_DIM, FUSION), full),
        pl.BlockSpec((1, FUSION), full),
        pl.BlockSpec((FUSION, CLS_PAD), full),
        pl.BlockSpec((1, CLS_PAD), full),
    ]

    # cost estimate matching actual traffic: f32 inputs read once, bf16 weights,
    # f32 biases, narrow f32 output, no pad/cast passes.
    flops = 2 * b_in * (T_IN * LANG_DIM + V_IN * VIS_DIM
                        + (LANG_DIM + VIS_DIM) * FUSION + FUSION * CLS_PAD)
    bytes_accessed = (
        b_in * (T_IN + V_IN) * 4
        + (wl.size + wv.size + wf_l.size + wf_v.size + wc_pad.size) * 2
        + (bl.size + bv.size + bf.size + bc_pad.size) * 4
        + b_in * NUM_CLASSES * 4)

    pred = pl.pallas_call(
        _fusion_kernel,
        out_shape=jax.ShapeDtypeStruct((b_in, NUM_CLASSES), jnp.float32),
        grid_spec=pltpu.PrefetchScalarGridSpec(
            num_scalar_prefetch=0,
            grid=(n_tiles,),
            in_specs=in_specs,
            # full last dim (== NUM_CLASSES) is allowed; OOB rows of the last tile are dropped
            out_specs=pl.BlockSpec((tile_b, NUM_CLASSES), lambda i: (i, 0)),
        ),
        compiler_params=pltpu.CompilerParams(
            dimension_semantics=("parallel",)),
        cost_estimate=pl.CostEstimate(
            flops=flops,
            transcendentals=b_in * CLS_PAD,
            bytes_accessed=bytes_accessed),
    )(text, img_flat, wl, bl, wv, bv, wf_l, wf_v, bf, wc_pad, bc_pad)

    loss = None  # label is None in this synthetic setup
    return pred, loss


def init_params(key):
    ks = jax.random.split(key, 8)
    scale = 0.02
    return {
        "wl": scale * jax.random.normal(ks[0], (T_IN, LANG_DIM), jnp.float32),
        "bl": scale * jax.random.normal(ks[1], (LANG_DIM,), jnp.float32),
        "wv": scale * jax.random.normal(ks[2], (V_IN, VIS_DIM), jnp.float32),
        "bv": scale * jax.random.normal(ks[3], (VIS_DIM,), jnp.float32),
        "wf": scale * jax.random.normal(ks[4], (LANG_DIM + VIS_DIM, FUSION), jnp.float32),
        "bf": scale * jax.random.normal(ks[5], (FUSION,), jnp.float32),
        "wc": scale * jax.random.normal(ks[6], (FUSION, NUM_CLASSES), jnp.float32),
        "bc": scale * jax.random.normal(ks[7], (NUM_CLASSES,), jnp.float32),
    }


def _reference_forward(text, image, p):
    """Pure-JAX f32 reference (eval-mode dropout == identity)."""
    tf_ = jax.nn.relu(text @ p["wl"] + p["bl"])
    vf_ = jax.nn.relu(image.reshape(image.shape[0], -1) @ p["wv"] + p["bv"])
    comb = jnp.concatenate([tf_, vf_], axis=1)
    fus = jax.nn.relu(comb @ p["wf"] + p["bf"])
    logits = fus @ p["wc"] + p["bc"]
    return jax.nn.softmax(logits, axis=1)


if __name__ == "__main__":
    key = jax.random.PRNGKey(0)
    k_text, k_img, k_par = jax.random.split(key, 3)
    text = jax.random.normal(k_text, (B, T_IN), jnp.float32)
    image = jax.random.normal(k_img, (B, C_IMG, H, W), jnp.float32)  # NCHW
    params = init_params(k_par)
    prepared = prepare_params(params)   # one-time: split/pad/cast hoisted out of hot path

    pred, loss = language_and_vision_concat(text, image, prepared)
    pred = jax.block_until_ready(pred)

    # sanity: shape, positivity, softmax rows sum to 1 (approx EUP reciprocal -> relaxed tol)
    assert pred.shape == (B, NUM_CLASSES)
    assert loss is None
    assert bool(jnp.all(pred > 0.0))
    assert bool(jnp.allclose(jnp.sum(pred, axis=-1), 1.0, atol=2e-3))

    # correctness vs. pure-JAX f32 reference (bf16 MXU inputs -> relaxed tolerance)
    ref = _reference_forward(text, image, params)
    assert bool(jnp.allclose(pred, ref, atol=2e-2))

    print("KERNEL_OK")
</pallas_src>

<mosaic_0001>
module attributes {stable_mosaic.version = 11 : i64} {
  func.func @_fusion_kernel(%arg0: i32, %arg1: memref<16x32xf32, #tpu.memory_space<vmem>>, %arg2: memref<16x1024xf32, #tpu.memory_space<vmem>>, %arg3: memref<32x32xbf16, #tpu.memory_space<vmem>>, %arg4: memref<1x32xf32, #tpu.memory_space<vmem>>, %arg5: memref<1024x32xbf16, #tpu.memory_space<vmem>>, %arg6: memref<1x32xf32, #tpu.memory_space<vmem>>, %arg7: memref<32x64xbf16, #tpu.memory_space<vmem>>, %arg8: memref<32x64xbf16, #tpu.memory_space<vmem>>, %arg9: memref<1x64xf32, #tpu.memory_space<vmem>>, %arg10: memref<64x128xbf16, #tpu.memory_space<vmem>>, %arg11: memref<1x128xf32, #tpu.memory_space<vmem>>, %arg12: memref<16x8xf32, #tpu.memory_space<vmem>>) attributes {dimension_semantics = [#tpu.dimension_semantics<parallel>], iteration_bounds = array<i64: 1>, scalar_prefetch = 0 : i64, scratch_operands = 0 : i64, tpu.core_type = #tpu.core_type<tc>, window_params = [{transform_indices = @transform_0, window_bounds = array<i64: 16, 32>}, {transform_indices = @transform_1, window_bounds = array<i64: 16, 1024>}, {pipeline_mode = #tpu.pipeline_mode<synchronous>, transform_indices = @transform_2, window_bounds = array<i64: 32, 32>}, {pipeline_mode = #tpu.pipeline_mode<synchronous>, transform_indices = @transform_3, window_bounds = array<i64: 1, 32>}, {pipeline_mode = #tpu.pipeline_mode<synchronous>, transform_indices = @transform_4, window_bounds = array<i64: 1024, 32>}, {pipeline_mode = #tpu.pipeline_mode<synchronous>, transform_indices = @transform_5, window_bounds = array<i64: 1, 32>}, {pipeline_mode = #tpu.pipeline_mode<synchronous>, transform_indices = @transform_6, window_bounds = array<i64: 32, 64>}, {pipeline_mode = #tpu.pipeline_mode<synchronous>, transform_indices = @transform_7, window_bounds = array<i64: 32, 64>}, {pipeline_mode = #tpu.pipeline_mode<synchronous>, transform_indices = @transform_8, window_bounds = array<i64: 1, 64>}, {pipeline_mode = #tpu.pipeline_mode<synchronous>, transform_indices = @transform_9, window_bounds = array<i64: 64, 128>}, {pipeline_mode = #tpu.pipeline_mode<synchronous>, transform_indices = @transform_10, window_bounds = array<i64: 1, 128>}, {transform_indices = @transform_11, window_bounds = array<i64: 16, 8>}]} {
    %c0 = arith.constant 0 : index
    %c0_0 = arith.constant 0 : index
    %0 = vector.load %arg1[%c0, %c0_0] : memref<16x32xf32, #tpu.memory_space<vmem>>, vector<16x32xf32>
    %1 = arith.truncf %0 : vector<16x32xf32> to vector<16x32xbf16>
    %c0_1 = arith.constant 0 : index
    %c0_2 = arith.constant 0 : index
    %2 = vector.load %arg3[%c0_1, %c0_2] : memref<32x32xbf16, #tpu.memory_space<vmem>>, vector<32x32xbf16>
    %cst = arith.constant dense<0.000000e+00> : vector<16x32xf32>
    %3 = tpu.matmul %1, %2, %cst {dimension_numbers = #tpu.dot_dimension_numbers<[1], [0], [0], [1], [0, 0, 1, 1], [], []>} : vector<16x32xbf16>, vector<32x32xbf16>, vector<16x32xf32> -> vector<16x32xf32>
    %c0_3 = arith.constant 0 : index
    %c0_4 = arith.constant 0 : index
    %4 = vector.load %arg4[%c0_3, %c0_4] : memref<1x32xf32, #tpu.memory_space<vmem>>, vector<1x32xf32>
    %5 = vector.broadcast %4 : vector<1x32xf32> to vector<16x32xf32>
    %6 = arith.addf %3, %5 : vector<16x32xf32>
    %cst_5 = arith.constant 0.000000e+00 : f32
    %7 = vector.broadcast %cst_5 : f32 to vector<16x32xf32>
    %8 = arith.maximumf %6, %7 : vector<16x32xf32>
    %c0_6 = arith.constant 0 : index
    %c0_7 = arith.constant 0 : index
    %9 = vector.load %arg2[%c0_6, %c0_7] : memref<16x1024xf32, #tpu.memory_space<vmem>>, vector<16x1024xf32>
    %10 = arith.truncf %9 : vector<16x1024xf32> to vector<16x1024xbf16>
    %c0_8 = arith.constant 0 : index
    %c0_9 = arith.constant 0 : index
    %11 = vector.load %arg5[%c0_8, %c0_9] : memref<1024x32xbf16, #tpu.memory_space<vmem>>, vector<1024x32xbf16>
    %cst_10 = arith.constant dense<0.000000e+00> : vector<16x32xf32>
    %12 = tpu.matmul %10, %11, %cst_10 {dimension_numbers = #tpu.dot_dimension_numbers<[1], [0], [0], [1], [0, 0, 1, 1], [], []>} : vector<16x1024xbf16>, vector<1024x32xbf16>, vector<16x32xf32> -> vector<16x32xf32>
    %c0_11 = arith.constant 0 : index
    %c0_12 = arith.constant 0 : index
    %13 = vector.load %arg6[%c0_11, %c0_12] : memref<1x32xf32, #tpu.memory_space<vmem>>, vector<1x32xf32>
    %14 = vector.broadcast %13 : vector<1x32xf32> to vector<16x32xf32>
    %15 = arith.addf %12, %14 : vector<16x32xf32>
    %cst_13 = arith.constant 0.000000e+00 : f32
    %16 = vector.broadcast %cst_13 : f32 to vector<16x32xf32>
    %17 = arith.maximumf %15, %16 : vector<16x32xf32>
    %18 = arith.truncf %8 : vector<16x32xf32> to vector<16x32xbf16>
    %c0_14 = arith.constant 0 : index
    %c0_15 = arith.constant 0 : index
    %19 = vector.load %arg7[%c0_14, %c0_15] : memref<32x64xbf16, #tpu.memory_space<vmem>>, vector<32x64xbf16>
    %cst_16 = arith.constant dense<0.000000e+00> : vector<16x64xf32>
    %20 = tpu.matmul %18, %19, %cst_16 {dimension_numbers = #tpu.dot_dimension_numbers<[1], [0], [0], [1], [0, 0, 1, 1], [], []>} : vector<16x32xbf16>, vector<32x64xbf16>, vector<16x64xf32> -> vector<16x64xf32>
    %21 = arith.truncf %17 : vector<16x32xf32> to vector<16x32xbf16>
    %c0_17 = arith.constant 0 : index
    %c0_18 = arith.constant 0 : index
    %22 = vector.load %arg8[%c0_17, %c0_18] : memref<32x64xbf16, #tpu.memory_space<vmem>>, vector<32x64xbf16>
    %cst_19 = arith.constant dense<0.000000e+00> : vector<16x64xf32>
    %23 = tpu.matmul %21, %22, %cst_19 {dimension_numbers = #tpu.dot_dimension_numbers<[1], [0], [0], [1], [0, 0, 1, 1], [], []>} : vector<16x32xbf16>, vector<32x64xbf16>, vector<16x64xf32> -> vector<16x64xf32>
    %24 = arith.addf %20, %23 : vector<16x64xf32>
    %c0_20 = arith.constant 0 : index
    %c0_21 = arith.constant 0 : index
    %25 = vector.load %arg9[%c0_20, %c0_21] : memref<1x64xf32, #tpu.memory_space<vmem>>, vector<1x64xf32>
    %26 = vector.broadcast %25 : vector<1x64xf32> to vector<16x64xf32>
    %27 = arith.addf %24, %26 : vector<16x64xf32>
    %cst_22 = arith.constant 0.000000e+00 : f32
    %28 = vector.broadcast %cst_22 : f32 to vector<16x64xf32>
    %29 = arith.maximumf %27, %28 : vector<16x64xf32>
    %30 = arith.truncf %29 : vector<16x64xf32> to vector<16x64xbf16>
    %c0_23 = arith.constant 0 : index
    %c0_24 = arith.constant 0 : index
    %31 = vector.load %arg10[%c0_23, %c0_24] : memref<64x128xbf16, #tpu.memory_space<vmem>>, vector<64x128xbf16>
    %cst_25 = arith.constant dense<0.000000e+00> : vector<16x128xf32>
    %32 = tpu.matmul %30, %31, %cst_25 {dimension_numbers = #tpu.dot_dimension_numbers<[1], [0], [0], [1], [0, 0, 1, 1], [], []>} : vector<16x64xbf16>, vector<64x128xbf16>, vector<16x128xf32> -> vector<16x128xf32>
    %c0_26 = arith.constant 0 : index
    %c0_27 = arith.constant 0 : index
    %33 = vector.load %arg11[%c0_26, %c0_27] : memref<1x128xf32, #tpu.memory_space<vmem>>, vector<1x128xf32>
    %34 = vector.broadcast %33 : vector<1x128xf32> to vector<16x128xf32>
    %35 = arith.addf %32, %34 : vector<16x128xf32>
    %cst_28 = arith.constant dense<0xFF800000> : vector<16xf32>
    %36 = vector.multi_reduction <maximumf>, %35, %cst_28 [1] : vector<16x128xf32> to vector<16xf32>
    %37 = vector.shape_cast %36 : vector<16xf32> to vector<16x1xf32>
    %38 = vector.broadcast %37 : vector<16x1xf32> to vector<16x128xf32>
    %39 = arith.subf %35, %38 : vector<16x128xf32>
    %40 = math.exp %39 : vector<16x128xf32>
    %cst_29 = arith.constant dense<0.000000e+00> : vector<16xf32>
    %41 = vector.multi_reduction <add>, %40, %cst_29 [1] : vector<16x128xf32> to vector<16xf32>
    %42 = vector.shape_cast %41 : vector<16xf32> to vector<16x1xf32>
    %43 = tpu.reciprocal %42 {approx = true} : vector<16x1xf32> -> vector<16x1xf32>
    %44 = vector.broadcast %43 : vector<16x1xf32> to vector<16x128xf32>
    %45 = arith.mulf %40, %44 : vector<16x128xf32>
    %46 = vector.extract_strided_slice %45 {offsets = [0, 0], sizes = [16, 8], strides = [1, 1]} : vector<16x128xf32> to vector<16x8xf32>
    %c0_30 = arith.constant 0 : index
    %c0_31 = arith.constant 0 : index
    %47 = vector.load %arg12[%c0_30, %c0_31] : memref<16x8xf32, #tpu.memory_space<vmem>>, vector<16x8xf32>
    tpu.vector_store %arg12[%c0_30, %c0_31], %46 {strides = array<i32>} : memref<16x8xf32, #tpu.memory_space<vmem>>, vector<16x8xf32>,
    return
  }
  func.func @transform_0(%arg0: i32) -> (i32, i32) {
    %c0_i32 = arith.constant 0 : i32
    %c0_i32_0 = arith.constant 0 : i32
    return %arg0, %c0_i32 : i32, i32
  }
  func.func @transform_1(%arg0: i32) -> (i32, i32) {
    %c0_i32 = arith.constant 0 : i32
    %c0_i32_0 = arith.constant 0 : i32
    return %arg0, %c0_i32 : i32, i32
  }
  func.func @transform_2(%arg0: i32) -> (i32, i32) {
    %c0_i32 = arith.constant 0 : i32
    %c0_i32_0 = arith.constant 0 : i32
    %c0_i32_1 = arith.constant 0 : i32
    return %c0_i32, %c0_i32_0 : i32, i32
  }
  func.func @transform_3(%arg0: i32) -> (i32, i32) {
    %c0_i32 = arith.constant 0 : i32
    %c0_i32_0 = arith.constant 0 : i32
    %c0_i32_1 = arith.constant 0 : i32
    return %c0_i32, %c0_i32_0 : i32, i32
  }
  func.func @transform_4(%arg0: i32) -> (i32, i32) {
    %c0_i32 = arith.constant 0 : i32
    %c0_i32_0 = arith.constant 0 : i32
    %c0_i32_1 = arith.constant 0 : i32
    return %c0_i32, %c0_i32_0 : i32, i32
  }
  func.func @transform_5(%arg0: i32) -> (i32, i32) {
    %c0_i32 = arith.constant 0 : i32
    %c0_i32_0 = arith.constant 0 : i32
    %c0_i32_1 = arith.constant 0 : i32
    return %c0_i32, %c0_i32_0 : i32, i32
  }
  func.func @transform_6(%arg0: i32) -> (i32, i32) {
    %c0_i32 = arith.constant 0 : i32
    %c0_i32_0 = arith.constant 0 : i32
    %c0_i32_1 = arith.constant 0 : i32
    return %c0_i32, %c0_i32_0 : i32, i32
  }
  func.func @transform_7(%arg0: i32) -> (i32, i32) {
    %c0_i32 = arith.constant 0 : i32
    %c0_i32_0 = arith.constant 0 : i32
    %c0_i32_1 = arith.constant 0 : i32
    return %c0_i32, %c0_i32_0 : i32, i32
  }
  func.func @transform_8(%arg0: i32) -> (i32, i32) {
    %c0_i32 = arith.constant 0 : i32
    %c0_i32_0 = arith.constant 0 : i32
    %c0_i32_1 = arith.constant 0 : i32
    return %c0_i32, %c0_i32_0 : i32, i32
  }
  func.func @transform_9(%arg0: i32) -> (i32, i32) {
    %c0_i32 = arith.constant 0 : i32
    %c0_i32_0 = arith.constant 0 : i32
    %c0_i32_1 = arith.constant 0 : i32
    return %c0_i32, %c0_i32_0 : i32, i32
  }
  func.func @transform_10(%arg0: i32) -> (i32, i32) {
    %c0_i32 = arith.constant 0 : i32
    %c0_i32_0 = arith.constant 0 : i32
    %c0_i32_1 = arith.constant 0 : i32
    return %c0_i32, %c0_i32_0 : i32, i32
  }
  func.func @transform_11(%arg0: i32) -> (i32, i32) {
    %c0_i32 = arith.constant 0 : i32
    %c0_i32_0 = arith.constant 0 : i32
    return %arg0, %c0_i32 : i32, i32
  }
}

</mosaic_0001>

<llo_original>
// kernel: language_and_vision_concat.1
$region0: #{language_and_vision_concat.1}
  #allocation0 [shape = 'u32[]', space=smem, size = 0x4, offset = 0x4, fixed_abs, tag = 'smem constant byte address 0x4 - core index']
  #allocation1 [shape = 'u32[72,128]{1,0:T(1,128)}', space=vmem, size = 0x9000, scoped, tag = 'internal scratch']
  %s0 = inlined_call_operand.vmem [shape: f32[2,32], index: 0, kind: input, shape index: {}]
  %s1 = inlined_call_operand.vmem [shape: f32[2,1024], index: 1, kind: input, shape index: {}]
  %s2 = inlined_call_operand.vmem [shape: bf16[32,32], index: 2, kind: input, shape index: {}]
  %s3 = inlined_call_operand.vmem [shape: f32[1,32], index: 3, kind: input, shape index: {}]
  %s4 = inlined_call_operand.vmem [shape: bf16[1024,32], index: 4, kind: input, shape index: {}]
  %s5 = inlined_call_operand.vmem [shape: f32[1,32], index: 5, kind: input, shape index: {}]
  %s6 = inlined_call_operand.vmem [shape: bf16[32,64], index: 6, kind: input, shape index: {}]
  %s7 = inlined_call_operand.vmem [shape: bf16[32,64], index: 7, kind: input, shape index: {}]
  %s8 = inlined_call_operand.vmem [shape: f32[1,64], index: 8, kind: input, shape index: {}]
  %s9 = inlined_call_operand.vmem [shape: bf16[64,128], index: 9, kind: input, shape index: {}]
  %s10 = inlined_call_operand.vmem [shape: f32[1,128], index: 10, kind: input, shape index: {}]
  %s11 = inlined_call_operand.hbm [shape: f32[2,8], index: 11, kind: output, shape index: {}]
  %s12 = sld [smem:[#allocation0]]
  $region54: #{language_and_vision_concat.1} parent=0
    _
  %s14 = ssub.s32 1, %s12
  %s15 = scalar_select 0, %s14, %s12
  $region1: #{language_and_vision_concat.1} parent=0
    #allocation2 [shape = 'u8[8192]{0}', space=vmem, size = 0x2000, scoped, tag = 'output window, operand 0, single buffered']
    #allocation3 [shape = 's32[1]{0}', space=sflag, size = 0x4, scoped, tag = 'scoped memory for language_and_vision_concat.1']
    %16 = vsyncpa [#allocation3], 0
    // Predicated region
    $region2: #{language_and_vision_concat.1} parent=1 // pred_check
      _
    $region3: #{language_and_vision_concat.1} parent=1 // pred_check_branch
      %18 = sbr.rel (0) target = $region5
    $region4: #{language_and_vision_concat.1} parent=1 // pred_region
      _
    $region5: #{language_and_vision_concat.1} parent=1 // pred_fallthru
      _
    // Predicated region
    $region6: #{language_and_vision_concat.1} parent=1 // pred_check
      _
    $region7: #{language_and_vision_concat.1} parent=1 // pred_check_branch
      %20 = sbr.rel (0) target = $region9
    $region8: #{language_and_vision_concat.1} parent=1 // pred_region
      _
    $region9: #{language_and_vision_concat.1} parent=1 // pred_fallthru
      _
    // Predicated region
    $region10: #{language_and_vision_concat.1} parent=1 // pred_check
      _
    $region11: #{language_and_vision_concat.1} parent=1 // pred_check_branch
      %22 = sbr.rel (0) target = $region13
    $region12: #{language_and_vision_concat.1} parent=1 // pred_region
      _
    $region13: #{language_and_vision_concat.1} parent=1 // pred_fallthru
      _
    // Predicated region
    $region14: #{language_and_vision_concat.1} parent=1 // pred_check
      _
    $region15: #{language_and_vision_concat.1} parent=1 // pred_check_branch
      %24 = sbr.rel (0) target = $region17
    $region16: #{language_and_vision_concat.1} parent=1 // pred_region
      _
    $region17: #{language_and_vision_concat.1} parent=1 // pred_fallthru
      _
    // Predicated region
    $region18: #{language_and_vision_concat.1} parent=1 // pred_check
      _
    $region19: #{language_and_vision_concat.1} parent=1 // pred_check_branch
      %26 = sbr.rel (0) target = $region21
    $region20: #{language_and_vision_concat.1} parent=1 // pred_region
      _
    $region21: #{language_and_vision_concat.1} parent=1 // pred_fallthru
      _
    // Predicated region
    $region22: #{language_and_vision_concat.1} parent=1 // pred_check
      _
    $region23: #{language_and_vision_concat.1} parent=1 // pred_check_branch
      %28 = sbr.rel (0) target = $region25
    $region24: #{language_and_vision_concat.1} parent=1 // pred_region
      _
    $region25: #{language_and_vision_concat.1} parent=1 // pred_fallthru
      _
    // Predicated region
    $region26: #{language_and_vision_concat.1} parent=1 // pred_check
      _
    $region27: #{language_and_vision_concat.1} parent=1 // pred_check_branch
      %30 = sbr.rel (0) target = $region29
    $region28: #{language_and_vision_concat.1} parent=1 // pred_region
      _
    $region29: #{language_and_vision_concat.1} parent=1 // pred_fallthru
      _
    // Predicated region
    $region30: #{language_and_vision_concat.1} parent=1 // pred_check
      _
    $region31: #{language_and_vision_concat.1} parent=1 // pred_check_branch
      %32 = sbr.rel (0) target = $region33
    $region32: #{language_and_vision_concat.1} parent=1 // pred_region
      _
    $region33: #{language_and_vision_concat.1} parent=1 // pred_fallthru
      _
    // Predicated region
    $region34: #{language_and_vision_concat.1} parent=1 // pred_check
      _
    $region35: #{language_and_vision_concat.1} parent=1 // pred_check_branch
      %34 = sbr.rel (0) target = $region37
    $region36: #{language_and_vision_concat.1} parent=1 // pred_region
      _
    $region37: #{language_and_vision_concat.1} parent=1 // pred_fallthru
      _
    // Predicated region
    $region38: #{language_and_vision_concat.1} parent=1 // pred_check
      _
    $region39: #{language_and_vision_concat.1} parent=1 // pred_check_branch
      %36 = sbr.rel (0) target = $region41
    $region40: #{language_and_vision_concat.1} parent=1 // pred_region
      _
    $region41: #{language_and_vision_concat.1} parent=1 // pred_fallthru
      _
    // Predicated region
    $region42: #{language_and_vision_concat.1} parent=1 // pred_check
      _
    $region43: #{language_and_vision_concat.1} parent=1 // pred_check_branch
      %38 = sbr.rel (0) target = $region45
    $region44: #{language_and_vision_concat.1} parent=1 // pred_region
      _
    $region45: #{language_and_vision_concat.1} parent=1 // pred_fallthru
      _
    %v40 = vld [vmem:[%s0] sm:$0xff]
    %v41 = vld [vmem:[%s0 + $0x8] sm:$0xff]
    %v42 = vpack.c.bf16 %v41, %v40
    %v43 = vld [vmem:[%s2] sm:$0xf]
    %v44 = vld [vmem:[%s2 + $0x4] sm:$0xf]
    %v45 = vld [vmem:[%s2 + $0x8] sm:$0xf]
    %v46 = vld [vmem:[%s2 + $0xc] sm:$0xf]
    %v47 = vld [vmem:[%s3] sm:$0x1]
    %v49 = vperm.slane %v47, 0
    %v55 = vunpack.c.l.b16 %v43
    %v56 = vunpack.c.l.b16 %v44
    %v57 = vunpack.c.l.b16 %v45
    %v58 = vunpack.c.l.b16 %v46
    %v59 = vpack.c.b16 %v56, %v55
    %v60 = vpack.c.b16 %v58, %v57
    %vm63 = vcmask 261120
    %v65 = vsel %vm63, %v42, 0
    %67 = vmatpush.bf16.msra.mxu0 0
    %68 = vmatpush.bf16.msra.mxu0 0
    %69 = vmatpush.bf16.msra.mxu0 0
    %70 = vmatpush.bf16.msra.mxu0 0
    %71 = vmatpush.bf16.msra.mxu0 0
    %72 = vmatpush.bf16.msra.mxu0 0
    %73 = vmatpush.bf16.msra.mxu0 %v60
    %74 = vmatpush.bf16.msra.mxu0 %v59
    %75 = vmatmul.bf16.gmra.mxu0 %v65
    %v76 = vpop.f32.mrf.mxu0
    %v77 = vadd.f32 %v49, %v76
    %v78 = vpop.f32.mrf.mxu0
    %v79 = vadd.f32 %v49, %v78
    %80 = vdwg.mxu0
    %v81 = vmax.f32 %v77, 0.0
    %v82 = vmax.f32 %v79, 0.0
    %v83 = vld [vmem:[%s1] sm:$0xff]
    %v84 = vld [vmem:[%s1 + $0x8] sm:$0xff]
    %v85 = vld [vmem:[%s1 + $0x10] sm:$0xff]
    %v86 = vld [vmem:[%s1 + $0x18] sm:$0xff]
    %v87 = vld [vmem:[%s1 + $0x20] sm:$0xff]
    %v88 = vld [vmem:[%s1 + $0x28] sm:$0xff]
    %v89 = vld [vmem:[%s1 + $0x30] sm:$0xff]
    %v90 = vld [vmem:[%s1 + $0x38] sm:$0xff]
    %v91 = vld [vmem:[%s1 + $0x40] sm:$0xff]
    %v92 = vld [vmem:[%s1 + $0x48] sm:$0xff]
    %v93 = vld [vmem:[%s1 + $0x50] sm:$0xff]
    %v94 = vld [vmem:[%s1 + $0x58] sm:$0xff]
    %v95 = vld [vmem:[%s1 + $0x60] sm:$0xff]
    %v96 = vld [vmem:[%s1 + $0x68] sm:$0xff]
    %v97 = vld [vmem:[%s1 + $0x70] sm:$0xff]
    %v98 = vld [vmem:[%s1 + $0x78] sm:$0xff]
    %115 = vst [vmem:[#allocation1] ss:$4 sm:$0xff] %v83
    %s116 = scalar_lea.vmem [#allocation1], 1
    %117 = vst [vmem:[%s116] ss:$4 sm:$0xff] %v85
    %s118 = scalar_lea.vmem [#allocation1], 2
    %119 = vst [vmem:[%s118] ss:$4 sm:$0xff] %v87
    %s120 = scalar_lea.vmem [#allocation1], 3
    %121 = vst [vmem:[%s120] ss:$4 sm:$0xff] %v89
    %s122 = scalar_lea.vmem [#allocation1], 32
    %123 = vst [vmem:[%s122] ss:$4 sm:$0xff] %v84
    %s124 = scalar_lea.vmem [#allocation1], 33
    %125 = vst [vmem:[%s124] ss:$4 sm:$0xff] %v86
    %s126 = scalar_lea.vmem [#allocation1], 34
    %127 = vst [vmem:[%s126] ss:$4 sm:$0xff] %v88
    %s128 = scalar_lea.vmem [#allocation1], 35
    %129 = vst [vmem:[%s128] ss:$4 sm:$0xff] %v90
    %v130 = vld.sshfl [vmem:[#allocation1] sm:$0xff pattern:$0x73625140]
    %v131 = vld.sshfl [vmem:[#allocation1 + $0x8] sm:$0xff pattern:$0x73625140]
    %v132 = vld.sshfl [vmem:[#allocation1 + $0x10] sm:$0xff pattern:$0x73625140]
    %v133 = vld.sshfl [vmem:[#allocation1 + $0x18] sm:$0xff pattern:$0x73625140]
    %v134 = vld.sshfl [vmem:[#allocation1 + $0x20] sm:$0xff pattern:$0x73625140]
    %v135 = vld.sshfl [vmem:[#allocation1 + $0x28] sm:$0xff pattern:$0x73625140]
    %v136 = vld.sshfl [vmem:[#allocation1 + $0x30] sm:$0xff pattern:$0x73625140]
    %v137 = vld.sshfl [vmem:[#allocation1 + $0x38] sm:$0xff pattern:$0x73625140]
    %138 = vst [vmem:[#allocation1] ss:$4 sm:$0xff] %v91
    %139 = vst [vmem:[%s116] ss:$4 sm:$0xff] %v93
    %140 = vst [vmem:[%s118] ss:$4 sm:$0xff] %v95
    %141 = vst [vmem:[%s120] ss:$4 sm:$0xff] %v97
    %142 = vst [vmem:[%s122] ss:$4 sm:$0xff] %v92
    %143 = vst [vmem:[%s124] ss:$4 sm:$0xff] %v94
    %144 = vst [vmem:[%s126] ss:$4 sm:$0xff] %v96
    %145 = vst [vmem:[%s128] ss:$4 sm:$0xff] %v98
    %v146 = vld.sshfl [vmem:[#allocation1] sm:$0xff pattern:$0x73625140]
    %v147 = vld.sshfl [vmem:[#allocation1 + $0x8] sm:$0xff pattern:$0x73625140]
    %v148 = vld.sshfl [vmem:[#allocation1 + $0x10] sm:$0xff pattern:$0x73625140]
    %v149 = vld.sshfl [vmem:[#allocation1 + $0x18] sm:$0xff pattern:$0x73625140]
    %v150 = vld.sshfl [vmem:[#allocation1 + $0x20] sm:$0xff pattern:$0x73625140]
    %v151 = vld.sshfl [vmem:[#allocation1 + $0x28] sm:$0xff pattern:$0x73625140]
    %v152 = vld.sshfl [vmem:[#allocation1 + $0x30] sm:$0xff pattern:$0x73625140]
    %v153 = vld.sshfl [vmem:[#allocation1 + $0x38] sm:$0xff pattern:$0x73625140]
    %v170 = vpack.c.bf16 %v146, %v130
    %v171 = vpack.c.bf16 %v147, %v131
    %v172 = vpack.c.bf16 %v148, %v132
    %v173 = vpack.c.bf16 %v149, %v133
    %v174 = vpack.c.bf16 %v150, %v134
    %v175 = vpack.c.bf16 %v151, %v135
    %v176 = vpack.c.bf16 %v152, %v136
    %v177 = vpack.c.bf16 %v153, %v137
    %v178 = vld [vmem:[%s4] sm:$0xf]
    %v179 = vld [vmem:[%s4 + $0x4] sm:$0xf]
    %v180 = vld [vmem:[%s4 + $0x8] sm:$0xf]
    %v181 = vld [vmem:[%s4 + $0xc] sm:$0xf]
    %v182 = vld [vmem:[%s4 + $0x10] sm:$0xf]
    %v183 = vld [vmem:[%s4 + $0x14] sm:$0xf]
    %v184 = vld [vmem:[%s4 + $0x18] sm:$0xf]
    %v185 = vld [vmem:[%s4 + $0x1c] sm:$0xf]
    %v186 = vld [vmem:[%s4 + $0x20] sm:$0xf]
    %v187 = vld [vmem:[%s4 + $0x24] sm:$0xf]
    %v188 = vld [vmem:[%s4 + $0x28] sm:$0xf]
    %v189 = vld [vmem:[%s4 + $0x2c] sm:$0xf]
    %v190 = vld [vmem:[%s4 + $0x30] sm:$0xf]
    %v191 = vld [vmem:[%s4 + $0x34] sm:$0xf]
    %v192 = vld [vmem:[%s4 + $0x38] sm:$0xf]
    %v193 = vld [vmem:[%s4 + $0x3c] sm:$0xf]
    %v194 = vld [vmem:[%s4 + $0x40] sm:$0xf]
    %v195 = vld [vmem:[%s4 + $0x44] sm:$0xf]
    %v196 = vld [vmem:[%s4 + $0x48] sm:$0xf]
    %v197 = vld [vmem:[%s4 + $0x4c] sm:$0xf]
    %v198 = vld [vmem:[%s4 + $0x50] sm:$0xf]
    %v199 = vld [vmem:[%s4 + $0x54] sm:$0xf]
    %v200 = vld [vmem:[%s4 + $0x58] sm:$0xf]
    %v201 = vld [vmem:[%s4 + $0x5c] sm:$0xf]
    %v202 = vld [vmem:[%s4 + $0x60] sm:$0xf]
    %v203 = vld [vmem:[%s4 + $0x64] sm:$0xf]
    %v204 = vld [vmem:[%s4 + $0x68] sm:$0xf]
    %v205 = vld [vmem:[%s4 + $0x6c] sm:$0xf]
    %v206 = vld [vmem:[%s4 + $0x70] sm:$0xf]
    %v207 = vld [vmem:[%s4 + $0x74] sm:$0xf]
    %v208 = vld [vmem:[%s4 + $0x78] sm:$0xf]
    %v209 = vld [vmem:[%s4 + $0x7c] sm:$0xf]
    %v210 = vld [vmem:[%s4 + $0x80] sm:$0xf]
    %v211 = vld [vmem:[%s4 + $0x84] sm:$0xf]
    %v212 = vld [vmem:[%s4 + $0x88] sm:$0xf]
    %v213 = vld [vmem:[%s4 + $0x8c] sm:$0xf]
    %v214 = vld [vmem:[%s4 + $0x90] sm:$0xf]
    %v215 = vld [vmem:[%s4 + $0x94] sm:$0xf]
    %v216 = vld [vmem:[%s4 + $0x98] sm:$0xf]
    %v217 = vld [vmem:[%s4 + $0x9c] sm:$0xf]
    %v218 = vld [vmem:[%s4 + $0xa0] sm:$0xf]
    %v219 = vld [vmem:[%s4 + $0xa4] sm:$0xf]
    %v220 = vld [vmem:[%s4 + $0xa8] sm:$0xf]
    %v221 = vld [vmem:[%s4 + $0xac] sm:$0xf]
    %v222 = vld [vmem:[%s4 + $0xb0] sm:$0xf]
    %v223 = vld [vmem:[%s4 + $0xb4] sm:$0xf]
    %v224 = vld [vmem:[%s4 + $0xb8] sm:$0xf]
    %v225 = vld [vmem:[%s4 + $0xbc] sm:$0xf]
    %v226 = vld [vmem:[%s4 + $0xc0] sm:$0xf]
    %v227 = vld [vmem:[%s4 + $0xc4] sm:$0xf]
    %v228 = vld [vmem:[%s4 + $0xc8] sm:$0xf]
    %v229 = vld [vmem:[%s4 + $0xcc] sm:$0xf]
    %v230 = vld [vmem:[%s4 + $0xd0] sm:$0xf]
    %v231 = vld [vmem:[%s4 + $0xd4] sm:$0xf]
    %v232 = vld [vmem:[%s4 + $0xd8] sm:$0xf]
    %v233 = vld [vmem:[%s4 + $0xdc] sm:$0xf]
    %v234 = vld [vmem:[%s4 + $0xe0] sm:$0xf]
    %v235 = vld [vmem:[%s4 + $0xe4] sm:$0xf]
    %v236 = vld [vmem:[%s4 + $0xe8] sm:$0xf]
    %v237 = vld [vmem:[%s4 + $0xec] sm:$0xf]
    %v238 = vld [vmem:[%s4 + $0xf0] sm:$0xf]
    %v239 = vld [vmem:[%s4 + $0xf4] sm:$0xf]
    %v240 = vld [vmem:[%s4 + $0xf8] sm:$0xf]
    %v241 = vld [vmem:[%s4 + $0xfc] sm:$0xf]
    %v242 = vld [vmem:[%s4 + $0x100] sm:$0xf]
    %v243 = vld [vmem:[%s4 + $0x104] sm:$0xf]
    %v244 = vld [vmem:[%s4 + $0x108] sm:$0xf]
    %v245 = vld [vmem:[%s4 + $0x10c] sm:$0xf]
    %v246 = vld [vmem:[%s4 + $0x110] sm:$0xf]
    %v247 = vld [vmem:[%s4 + $0x114] sm:$0xf]
    %v248 = vld [vmem:[%s4 + $0x118] sm:$0xf]
    %v249 = vld [vmem:[%s4 + $0x11c] sm:$0xf]
    %v250 = vld [vmem:[%s4 + $0x120] sm:$0xf]
    %v251 = vld [vmem:[%s4 + $0x124] sm:$0xf]
    %v252 = vld [vmem:[%s4 + $0x128] sm:$0xf]
    %v253 = vld [vmem:[%s4 + $0x12c] sm:$0xf]
    %v254 = vld [vmem:[%s4 + $0x130] sm:$0xf]
    %v255 = vld [vmem:[%s4 + $0x134] sm:$0xf]
    %v256 = vld [vmem:[%s4 + $0x138] sm:$0xf]
    %v257 = vld [vmem:[%s4 + $0x13c] sm:$0xf]
    %v258 = vld [vmem:[%s4 + $0x140] sm:$0xf]
    %v259 = vld [vmem:[%s4 + $0x144] sm:$0xf]
    %v260 = vld [vmem:[%s4 + $0x148] sm:$0xf]
    %v261 = vld [vmem:[%s4 + $0x14c] sm:$0xf]
    %v262 = vld [vmem:[%s4 + $0x150] sm:$0xf]
    %v263 = vld [vmem:[%s4 + $0x154] sm:$0xf]
    %v264 = vld [vmem:[%s4 + $0x158] sm:$0xf]
    %v265 = vld [vmem:[%s4 + $0x15c] sm:$0xf]
    %v266 = vld [vmem:[%s4 + $0x160] sm:$0xf]
    %v267 = vld [vmem:[%s4 + $0x164] sm:$0xf]
    %v268 = vld [vmem:[%s4 + $0x168] sm:$0xf]
    %v269 = vld [vmem:[%s4 + $0x16c] sm:$0xf]
    %v270 = vld [vmem:[%s4 + $0x170] sm:$0xf]
    %v271 = vld [vmem:[%s4 + $0x174] sm:$0xf]
    %v272 = vld [vmem:[%s4 + $0x178] sm:$0xf]
    %v273 = vld [vmem:[%s4 + $0x17c] sm:$0xf]
    %v274 = vld [vmem:[%s4 + $0x180] sm:$0xf]
    %v275 = vld [vmem:[%s4 + $0x184] sm:$0xf]
    %v276 = vld [vmem:[%s4 + $0x188] sm:$0xf]
    %v277 = vld [vmem:[%s4 + $0x18c] sm:$0xf]
    %v278 = vld [vmem:[%s4 + $0x190] sm:$0xf]
    %v279 = vld [vmem:[%s4 + $0x194] sm:$0xf]
    %v280 = vld [vmem:[%s4 + $0x198] sm:$0xf]
    %v281 = vld [vmem:[%s4 + $0x19c] sm:$0xf]
    %v282 = vld [vmem:[%s4 + $0x1a0] sm:$0xf]
    %v283 = vld [vmem:[%s4 + $0x1a4] sm:$0xf]
    %v284 = vld [vmem:[%s4 + $0x1a8] sm:$0xf]
    %v285 = vld [vmem:[%s4 + $0x1ac] sm:$0xf]
    %v286 = vld [vmem:[%s4 + $0x1b0] sm:$0xf]
    %v287 = vld [vmem:[%s4 + $0x1b4] sm:$0xf]
    %v288 = vld [vmem:[%s4 + $0x1b8] sm:$0xf]
    %v289 = vld [vmem:[%s4 + $0x1bc] sm:$0xf]
    %v290 = vld [vmem:[%s4 + $0x1c0] sm:$0xf]
    %v291 = vld [vmem:[%s4 + $0x1c4] sm:$0xf]
    %v292 = vld [vmem:[%s4 + $0x1c8] sm:$0xf]
    %v293 = vld [vmem:[%s4 + $0x1cc] sm:$0xf]
    %v294 = vld [vmem:[%s4 + $0x1d0] sm:$0xf]
    %v295 = vld [vmem:[%s4 + $0x1d4] sm:$0xf]
    %v296 = vld [vmem:[%s4 + $0x1d8] sm:$0xf]
    %v297 = vld [vmem:[%s4 + $0x1dc] sm:$0xf]
    %v298 = vld [vmem:[%s4 + $0x1e0] sm:$0xf]
    %v299 = vld [vmem:[%s4 + $0x1e4] sm:$0xf]
    %v300 = vld [vmem:[%s4 + $0x1e8] sm:$0xf]
    %v301 = vld [vmem:[%s4 + $0x1ec] sm:$0xf]
    %v302 = vld [vmem:[%s4 + $0x1f0] sm:$0xf]
    %v303 = vld [vmem:[%s4 + $0x1f4] sm:$0xf]
    %v304 = vld [vmem:[%s4 + $0x1f8] sm:$0xf]
    %v305 = vld [vmem:[%s4 + $0x1fc] sm:$0xf]
    %v306 = vld [vmem:[%s5] sm:$0x1]
    %v308 = vperm.slane %v306, 0
    %v438 = vunpack.c.l.b16 %v178
    %v439 = vunpack.c.l.b16 %v179
    %v440 = vunpack.c.l.b16 %v180
    %v441 = vunpack.c.l.b16 %v181
    %v442 = vunpack.c.l.b16 %v182
    %v443 = vunpack.c.l.b16 %v183
    %v444 = vunpack.c.l.b16 %v184
    %v445 = vunpack.c.l.b16 %v185
    %v446 = vunpack.c.l.b16 %v186
    %v447 = vunpack.c.l.b16 %v187
    %v448 = vunpack.c.l.b16 %v188
    %v449 = vunpack.c.l.b16 %v189
    %v450 = vunpack.c.l.b16 %v190
    %v451 = vunpack.c.l.b16 %v191
    %v452 = vunpack.c.l.b16 %v192
    %v453 = vunpack.c.l.b16 %v193
    %v454 = vunpack.c.l.b16 %v194
    %v455 = vunpack.c.l.b16 %v195
    %v456 = vunpack.c.l.b16 %v196
    %v457 = vunpack.c.l.b16 %v197
    %v458 = vunpack.c.l.b16 %v198
    %v459 = vunpack.c.l.b16 %v199
    %v460 = vunpack.c.l.b16 %v200
    %v461 = vunpack.c.l.b16 %v201
    %v462 = vunpack.c.l.b16 %v202
    %v463 = vunpack.c.l.b16 %v203
    %v464 = vunpack.c.l.b16 %v204
    %v465 = vunpack.c.l.b16 %v205
    %v466 = vunpack.c.l.b16 %v206
    %v467 = vunpack.c.l.b16 %v207
    %v468 = vunpack.c.l.b16 %v208
    %v469 = vunpack.c.l.b16 %v209
    %v470 = vunpack.c.l.b16 %v210
    %v471 = vunpack.c.l.b16 %v211
    %v472 = vunpack.c.l.b16 %v212
    %v473 = vunpack.c.l.b16 %v213
    %v474 = vunpack.c.l.b16 %v214
    %v475 = vunpack.c.l.b16 %v215
    %v476 = vunpack.c.l.b16 %v216
    %v477 = vunpack.c.l.b16 %v217
    %v478 = vunpack.c.l.b16 %v218
    %v479 = vunpack.c.l.b16 %v219
    %v480 = vunpack.c.l.b16 %v220
    %v481 = vunpack.c.l.b16 %v221
    %v482 = vunpack.c.l.b16 %v222
    %v483 = vunpack.c.l.b16 %v223
    %v484 = vunpack.c.l.b16 %v224
    %v485 = vunpack.c.l.b16 %v225
    %v486 = vunpack.c.l.b16 %v226
    %v487 = vunpack.c.l.b16 %v227
    %v488 = vunpack.c.l.b16 %v228
    %v489 = vunpack.c.l.b16 %v229
    %v490 = vunpack.c.l.b16 %v230
    %v491 = vunpack.c.l.b16 %v231
    %v492 = vunpack.c.l.b16 %v232
    %v493 = vunpack.c.l.b16 %v233
    %v494 = vunpack.c.l.b16 %v234
    %v495 = vunpack.c.l.b16 %v235
    %v496 = vunpack.c.l.b16 %v236
    %v497 = vunpack.c.l.b16 %v237
    %v498 = vunpack.c.l.b16 %v238
    %v499 = vunpack.c.l.b16 %v239
    %v500 = vunpack.c.l.b16 %v240
    %v501 = vunpack.c.l.b16 %v241
    %v502 = vunpack.c.l.b16 %v242
    %v503 = vunpack.c.l.b16 %v243
    %v504 = vunpack.c.l.b16 %v244
    %v505 = vunpack.c.l.b16 %v245
    %v506 = vunpack.c.l.b16 %v246
    %v507 = vunpack.c.l.b16 %v247
    %v508 = vunpack.c.l.b16 %v248
    %v509 = vunpack.c.l.b16 %v249
    %v510 = vunpack.c.l.b16 %v250
    %v511 = vunpack.c.l.b16 %v251
    %v512 = vunpack.c.l.b16 %v252
    %v513 = vunpack.c.l.b16 %v253
    %v514 = vunpack.c.l.b16 %v254
    %v515 = vunpack.c.l.b16 %v255
    %v516 = vunpack.c.l.b16 %v256
    %v517 = vunpack.c.l.b16 %v257
    %v518 = vunpack.c.l.b16 %v258
    %v519 = vunpack.c.l.b16 %v259
    %v520 = vunpack.c.l.b16 %v260
    %v521 = vunpack.c.l.b16 %v261
    %v522 = vunpack.c.l.b16 %v262
    %v523 = vunpack.c.l.b16 %v263
    %v524 = vunpack.c.l.b16 %v264
    %v525 = vunpack.c.l.b16 %v265
    %v526 = vunpack.c.l.b16 %v266
    %v527 = vunpack.c.l.b16 %v267
    %v528 = vunpack.c.l.b16 %v268
    %v529 = vunpack.c.l.b16 %v269
    %v530 = vunpack.c.l.b16 %v270
    %v531 = vunpack.c.l.b16 %v271
    %v532 = vunpack.c.l.b16 %v272
    %v533 = vunpack.c.l.b16 %v273
    %v534 = vunpack.c.l.b16 %v274
    %v535 = vunpack.c.l.b16 %v275
    %v536 = vunpack.c.l.b16 %v276
    %v537 = vunpack.c.l.b16 %v277
    %v538 = vunpack.c.l.b16 %v278
    %v539 = vunpack.c.l.b16 %v279
    %v540 = vunpack.c.l.b16 %v280
    %v541 = vunpack.c.l.b16 %v281
    %v542 = vunpack.c.l.b16 %v282
    %v543 = vunpack.c.l.b16 %v283
    %v544 = vunpack.c.l.b16 %v284
    %v545 = vunpack.c.l.b16 %v285
    %v546 = vunpack.c.l.b16 %v286
    %v547 = vunpack.c.l.b16 %v287
    %v548 = vunpack.c.l.b16 %v288
    %v549 = vunpack.c.l.b16 %v289
    %v550 = vunpack.c.l.b16 %v290
    %v551 = vunpack.c.l.b16 %v291
    %v552 = vunpack.c.l.b16 %v292
    %v553 = vunpack.c.l.b16 %v293
    %v554 = vunpack.c.l.b16 %v294
    %v555 = vunpack.c.l.b16 %v295
    %v556 = vunpack.c.l.b16 %v296
    %v557 = vunpack.c.l.b16 %v297
    %v558 = vunpack.c.l.b16 %v298
    %v559 = vunpack.c.l.b16 %v299
    %v560 = vunpack.c.l.b16 %v300
    %v561 = vunpack.c.l.b16 %v301
    %v562 = vunpack.c.l.b16 %v302
    %v563 = vunpack.c.l.b16 %v303
    %v564 = vunpack.c.l.b16 %v304
    %v565 = vunpack.c.l.b16 %v305
    %v566 = vpack.c.b16 %v439, %v438
    %v567 = vpack.c.b16 %v441, %v440
    %v568 = vpack.c.b16 %v443, %v442
    %v569 = vpack.c.b16 %v445, %v444
    %v570 = vpack.c.b16 %v447, %v446
    %v571 = vpack.c.b16 %v449, %v448
    %v572 = vpack.c.b16 %v451, %v450
    %v573 = vpack.c.b16 %v453, %v452
    %v574 = vpack.c.b16 %v455, %v454
    %v575 = vpack.c.b16 %v457, %v456
    %v576 = vpack.c.b16 %v459, %v458
    %v577 = vpack.c.b16 %v461, %v460
    %v578 = vpack.c.b16 %v463, %v462
    %v579 = vpack.c.b16 %v465, %v464
    %v580 = vpack.c.b16 %v467, %v466
    %v581 = vpack.c.b16 %v469, %v468
    %v582 = vpack.c.b16 %v471, %v470
    %v583 = vpack.c.b16 %v473, %v472
    %v584 = vpack.c.b16 %v475, %v474
    %v585 = vpack.c.b16 %v477, %v476
    %v586 = vpack.c.b16 %v479, %v478
    %v587 = vpack.c.b16 %v481, %v480
    %v588 = vpack.c.b16 %v483, %v482
    %v589 = vpack.c.b16 %v485, %v484
    %v590 = vpack.c.b16 %v487, %v486
    %v591 = vpack.c.b16 %v489, %v488
    %v592 = vpack.c.b16 %v491, %v490
    %v593 = vpack.c.b16 %v493, %v492
    %v594 = vpack.c.b16 %v495, %v494
    %v595 = vpack.c.b16 %v497, %v496
    %v596 = vpack.c.b16 %v499, %v498
    %v597 = vpack.c.b16 %v501, %v500
    %v598 = vpack.c.b16 %v503, %v502
    %v599 = vpack.c.b16 %v505, %v504
    %v600 = vpack.c.b16 %v507, %v506
    %v601 = vpack.c.b16 %v509, %v508
    %v602 = vpack.c.b16 %v511, %v510
    %v603 = vpack.c.b16 %v513, %v512
    %v604 = vpack.c.b16 %v515, %v514
    %v605 = vpack.c.b16 %v517, %v516
    %v606 = vpack.c.b16 %v519, %v518
    %v607 = vpack.c.b16 %v521, %v520
    %v608 = vpack.c.b16 %v523, %v522
    %v609 = vpack.c.b16 %v525, %v524
    %v610 = vpack.c.b16 %v527, %v526
    %v611 = vpack.c.b16 %v529, %v528
    %v612 = vpack.c.b16 %v531, %v530
    %v613 = vpack.c.b16 %v533, %v532
    %v614 = vpack.c.b16 %v535, %v534
    %v615 = vpack.c.b16 %v537, %v536
    %v616 = vpack.c.b16 %v539, %v538
    %v617 = vpack.c.b16 %v541, %v540
    %v618 = vpack.c.b16 %v543, %v542
    %v619 = vpack.c.b16 %v545, %v544
    %v620 = vpack.c.b16 %v547, %v546
    %v621 = vpack.c.b16 %v549, %v548
    %v622 = vpack.c.b16 %v551, %v550
    %v623 = vpack.c.b16 %v553, %v552
    %v624 = vpack.c.b16 %v555, %v554
    %v625 = vpack.c.b16 %v557, %v556
    %v626 = vpack.c.b16 %v559, %v558
    %v627 = vpack.c.b16 %v561, %v560
    %v628 = vpack.c.b16 %v563, %v562
    %v629 = vpack.c.b16 %v565, %v564
    %694 = vmatpush.bf16.msra.mxu0 %v573
    %695 = vmatpush.bf16.msra.mxu0 %v572
    %696 = vmatpush.bf16.msra.mxu0 %v571
    %697 = vmatpush.bf16.msra.mxu0 %v570
    %698 = vmatpush.bf16.msra.mxu0 %v569
    %699 = vmatpush.bf16.msra.mxu0 %v568
    %700 = vmatpush.bf16.msra.mxu0 %v567
    %701 = vmatpush.bf16.msra.mxu0 %v566
    %702 = vmatmul.bf16.gmra.mxu0 %v170
    %v703 = vpop.f32.mrf.mxu0
    %v704 = vadd.f32 %v308, %v703
    %v705 = vpop.f32.mrf.mxu0
    %v706 = vadd.f32 %v308, %v705
    %707 = vdwg.mxu0
    %708 = vmatpush.bf16.msra.mxu0 %v581
    %709 = vmatpush.bf16.msra.mxu0 %v580
    %710 = vmatpush.bf16.msra.mxu0 %v579
    %711 = vmatpush.bf16.msra.mxu0 %v578
    %712 = vmatpush.bf16.msra.mxu0 %v577
    %713 = vmatpush.bf16.msra.mxu0 %v576
    %714 = vmatpush.bf16.msra.mxu0 %v575
    %715 = vmatpush.bf16.msra.mxu0 %v574
    %716 = vmatmul.bf16.gmra.mxu0 %v171
    %v717 = vpop.f32.mrf.mxu0
    %v718 = vadd.f32 %v704, %v717
    %v719 = vpop.f32.mrf.mxu0
    %v720 = vadd.f32 %v706, %v719
    %721 = vdwg.mxu0
    %722 = vmatpush.bf16.msra.mxu0 %v589
    %723 = vmatpush.bf16.msra.mxu0 %v588
    %724 = vmatpush.bf16.msra.mxu0 %v587
    %725 = vmatpush.bf16.msra.mxu0 %v586
    %726 = vmatpush.bf16.msra.mxu0 %v585
    %727 = vmatpush.bf16.msra.mxu0 %v584
    %728 = vmatpush.bf16.msra.mxu0 %v583
    %729 = vmatpush.bf16.msra.mxu0 %v582
    %730 = vmatmul.bf16.gmra.mxu0 %v172
    %v731 = vpop.f32.mrf.mxu0
    %v732 = vadd.f32 %v718, %v731
    %v733 = vpop.f32.mrf.mxu0
    %v734 = vadd.f32 %v720, %v733
    %735 = vdwg.mxu0
    %736 = vmatpush.bf16.msra.mxu0 %v597
    %737 = vmatpush.bf16.msra.mxu0 %v596
    %738 = vmatpush.bf16.msra.mxu0 %v595
    %739 = vmatpush.bf16.msra.mxu0 %v594
    %740 = vmatpush.bf16.msra.mxu0 %v593
    %741 = vmatpush.bf16.msra.mxu0 %v592
    %742 = vmatpush.bf16.msra.mxu0 %v591
    %743 = vmatpush.bf16.msra.mxu0 %v590
    %744 = vmatmul.bf16.gmra.mxu0 %v173
    %v745 = vpop.f32.mrf.mxu0
    %v746 = vadd.f32 %v732, %v745
    %v747 = vpop.f32.mrf.mxu0
    %v748 = vadd.f32 %v734, %v747
    %749 = vdwg.mxu0
    %750 = vmatpush.bf16.msra.mxu0 %v605
    %751 = vmatpush.bf16.msra.mxu0 %v604
    %752 = vmatpush.bf16.msra.mxu0 %v603
    %753 = vmatpush.bf16.msra.mxu0 %v602
    %754 = vmatpush.bf16.msra.mxu0 %v601
    %755 = vmatpush.bf16.msra.mxu0 %v600
    %756 = vmatpush.bf16.msra.mxu0 %v599
    %757 = vmatpush.bf16.msra.mxu0 %v598
    %758 = vmatmul.bf16.gmra.mxu0 %v174
    %v759 = vpop.f32.mrf.mxu0
    %v760 = vadd.f32 %v746, %v759
    %v761 = vpop.f32.mrf.mxu0
    %v762 = vadd.f32 %v748, %v761
    %763 = vdwg.mxu0
    %764 = vmatpush.bf16.msra.mxu0 %v613
    %765 = vmatpush.bf16.msra.mxu0 %v612
    %766 = vmatpush.bf16.msra.mxu0 %v611
    %767 = vmatpush.bf16.msra.mxu0 %v610
    %768 = vmatpush.bf16.msra.mxu0 %v609
    %769 = vmatpush.bf16.msra.mxu0 %v608
    %770 = vmatpush.bf16.msra.mxu0 %v607
    %771 = vmatpush.bf16.msra.mxu0 %v606
    %772 = vmatmul.bf16.gmra.mxu0 %v175
    %v773 = vpop.f32.mrf.mxu0
    %v774 = vadd.f32 %v760, %v773
    %v775 = vpop.f32.mrf.mxu0
    %v776 = vadd.f32 %v762, %v775
    %777 = vdwg.mxu0
    %778 = vmatpush.bf16.msra.mxu0 %v621
    %779 = vmatpush.bf16.msra.mxu0 %v620
    %780 = vmatpush.bf16.msra.mxu0 %v619
    %781 = vmatpush.bf16.msra.mxu0 %v618
    %782 = vmatpush.bf16.msra.mxu0 %v617
    %783 = vmatpush.bf16.msra.mxu0 %v616
    %784 = vmatpush.bf16.msra.mxu0 %v615
    %785 = vmatpush.bf16.msra.mxu0 %v614
    %786 = vmatmul.bf16.gmra.mxu0 %v176
    %v787 = vpop.f32.mrf.mxu0
    %v788 = vadd.f32 %v774, %v787
    %v789 = vpop.f32.mrf.mxu0
    %v790 = vadd.f32 %v776, %v789
    %791 = vdwg.mxu0
    %792 = vmatpush.bf16.msra.mxu0 %v629
    %793 = vmatpush.bf16.msra.mxu0 %v628
    %794 = vmatpush.bf16.msra.mxu0 %v627
    %795 = vmatpush.bf16.msra.mxu0 %v626
    %796 = vmatpush.bf16.msra.mxu0 %v625
    %797 = vmatpush.bf16.msra.mxu0 %v624
    %798 = vmatpush.bf16.msra.mxu0 %v623
    %799 = vmatpush.bf16.msra.mxu0 %v622
    %800 = vmatmul.bf16.gmra.mxu0 %v177
    %v801 = vpop.f32.mrf.mxu0
    %v802 = vadd.f32 %v788, %v801
    %v803 = vpop.f32.mrf.mxu0
    %v804 = vadd.f32 %v790, %v803
    %805 = vdwg.mxu0
    %v806 = vmax.f32 %v802, 0.0
    %v807 = vmax.f32 %v804, 0.0
    %v808 = vpack.c.bf16 %v82, %v81
    %v809 = vld [vmem:[%s6] sm:$0xf]
    %v810 = vld [vmem:[%s6 + $0x4] sm:$0xf]
    %v811 = vld [vmem:[%s6 + $0x8] sm:$0xf]
    %v812 = vld [vmem:[%s6 + $0xc] sm:$0xf]
    %v813 = vpack.c.bf16 %v807, %v806
    %v814 = vld [vmem:[%s7] sm:$0xf]
    %v815 = vld [vmem:[%s7 + $0x4] sm:$0xf]
    %v816 = vld [vmem:[%s7 + $0x8] sm:$0xf]
    %v817 = vld [vmem:[%s7 + $0xc] sm:$0xf]
    %v822 = vunpack.c.l.b16 %v814
    %v823 = vunpack.c.l.b16 %v815
    %v824 = vunpack.c.l.b16 %v816
    %v825 = vunpack.c.l.b16 %v817
    %v826 = vpack.c.b16 %v823, %v822
    %v827 = vpack.c.b16 %v825, %v824
    %v831 = vsel %vm63, %v813, 0
    %833 = vmatpush.bf16.msra.mxu0 0
    %834 = vmatpush.bf16.msra.mxu0 0
    %835 = vmatpush.bf16.msra.mxu0 0
    %836 = vmatpush.bf16.msra.mxu0 0
    %837 = vmatpush.bf16.msra.mxu0 0
    %838 = vmatpush.bf16.msra.mxu0 0
    %839 = vmatpush.bf16.msra.mxu0 %v827
    %840 = vmatpush.bf16.msra.mxu0 %v826
    %841 = vmatmul.bf16.gmra.mxu0 %v831
    %v842 = vpop.f32.mrf.mxu0
    %v843 = vadd.f32 0.0, %v842
    %v844 = vpop.f32.mrf.mxu0
    %v845 = vadd.f32 0.0, %v844
    %846 = vdwg.mxu0
    %v851 = vunpack.c.l.b16 %v809
    %v852 = vunpack.c.l.b16 %v810
    %v853 = vunpack.c.l.b16 %v811
    %v854 = vunpack.c.l.b16 %v812
    %v855 = vpack.c.b16 %v852, %v851
    %v856 = vpack.c.b16 %v854, %v853
    %v860 = vsel %vm63, %v808, 0
    %862 = vmatpush.bf16.msra.mxu0 0
    %863 = vmatpush.bf16.msra.mxu0 0
    %864 = vmatpush.bf16.msra.mxu0 0
    %865 = vmatpush.bf16.msra.mxu0 0
    %866 = vmatpush.bf16.msra.mxu0 0
    %867 = vmatpush.bf16.msra.mxu0 0
    %868 = vmatpush.bf16.msra.mxu0 %v856
    %869 = vmatpush.bf16.msra.mxu0 %v855
    %870 = vmatmul.bf16.gmra.mxu0 %v860
    %v871 = vpop.f32.mrf.mxu0
    %v872 = vadd.f32 %v843, %v871
    %v873 = vpop.f32.mrf.mxu0
    %v874 = vadd.f32 %v845, %v873
    %875 = vdwg.mxu0
    %v876 = vld [vmem:[%s8] sm:$0x1]
    %v878 = vperm.slane %v876, 0
    %v880 = vadd.f32 %v872, %v878
    %v881 = vadd.f32 %v874, %v878
    %v882 = vmax.f32 %v880, 0.0
    %v883 = vmax.f32 %v881, 0.0
    %v884 = vpack.c.bf16 %v883, %v882
    %v885 = vld [vmem:[%s9] sm:$0xf]
    %v886 = vld [vmem:[%s9 + $0x4] sm:$0xf]
    %v887 = vld [vmem:[%s9 + $0x8] sm:$0xf]
    %v888 = vld [vmem:[%s9 + $0xc] sm:$0xf]
    %v889 = vld [vmem:[%s9 + $0x10] sm:$0xf]
    %v890 = vld [vmem:[%s9 + $0x14] sm:$0xf]
    %v891 = vld [vmem:[%s9 + $0x18] sm:$0xf]
    %v892 = vld [vmem:[%s9 + $0x1c] sm:$0xf]
    %v893 = vld [vmem:[%s10] sm:$0x1]
    %v895 = vperm.slane %v893, 0
    %v905 = vunpack.c.l.b16 %v885
    %v906 = vunpack.c.l.b16 %v886
    %v907 = vunpack.c.l.b16 %v887
    %v908 = vunpack.c.l.b16 %v888
    %v909 = vunpack.c.l.b16 %v889
    %v910 = vunpack.c.l.b16 %v890
    %v911 = vunpack.c.l.b16 %v891
    %v912 = vunpack.c.l.b16 %v892
    %v913 = vpack.c.b16 %v906, %v905
    %v914 = vpack.c.b16 %v908, %v907
    %v915 = vpack.c.b16 %v910, %v909
    %v916 = vpack.c.b16 %v912, %v911
    %vm921 = vcmask 523264
    %v923 = vsel %vm921, %v884, 0
    %925 = vmatpush.bf16.msra.mxu0 0
    %926 = vmatpush.bf16.msra.mxu0 0
    %927 = vmatpush.bf16.msra.mxu0 0
    %928 = vmatpush.bf16.msra.mxu0 0
    %929 = vmatpush.bf16.msra.mxu0 %v916
    %930 = vmatpush.bf16.msra.mxu0 %v915
    %931 = vmatpush.bf16.msra.mxu0 %v914
    %932 = vmatpush.bf16.msra.mxu0 %v913
    %933 = vmatmul.bf16.gmra.mxu0 %v923
    %v934 = vpop.f32.mrf.mxu0
    %v935 = vadd.f32 %v895, %v934
    %v936 = vpop.f32.mrf.mxu0
    %v937 = vadd.f32 %v895, %v936
    %938 = vdwg.mxu0
    %939 = vmax.xlane.f32.xlu0 %v935
    %v940 = vpop.xlane.xlu0 %939
    %941 = vmax.xlane.f32.xlu0 %v937
    %v942 = vpop.xlane.xlu0 %941
    %v943 = vsub.f32 %v935, %v940
    %v944 = vsub.f32 %v937, %v942
    %v945 = vmul.f32 %v943, 1.442695
    %v946 = vpow.pop %v945
    %v947 = vmul.f32 %v944, 1.442695
    %v948 = vpow.pop %v947
    %949 = vadd.xlane.f32.xlu0 %v946
    %v950 = vpop.xlane.xlu0 %949
    %951 = vadd.xlane.f32.xlu0 %v948
    %v952 = vpop.xlane.xlu0 %951
    %v953 = vrcp.pop %v950
    %v954 = vrcp.pop %v952
    %v955 = vmul.f32 %v946, %v953
    %v956 = vmul.f32 %v948, %v954
    %vm957 = vcmask 64512
    %958 = vst.msk [vmem:[#allocation2] sm:$0xff] %vm957, %v955
    %959 = vst.msk [vmem:[#allocation2 + $0x8] sm:$0xff] %vm957, %v956
    // Predicated region
    $region46: #{language_and_vision_concat.1} parent=1 // pred_check
      _
    $region47: #{language_and_vision_concat.1} parent=1 // pred_check_branch
      %961 = sbr.rel (0) target = $region49
    $region48: #{language_and_vision_concat.1} parent=1 // pred_region
      %963 = vsyncadd [#allocation3], 224
      %s964 = sshll.u32 [#allocation2], 4
      %s965 = int_to_ptr.vmem [resolvable:$true] %s964
      %s966 = sshll.u32 %s11, 4
      %s967 = int_to_ptr.hbm [resolvable:$true] %s966
      %972 = dma.vmem_to_hbm [thread:$0]  %s965, 32, %s967, [#allocation3], 32, 32, 2
    $region49: #{language_and_vision_concat.1} parent=1 // pred_fallthru
      _
    // Predicated region
    $region50: #{language_and_vision_concat.1} parent=1 // pred_check
      _
    $region51: #{language_and_vision_concat.1} parent=1 // pred_check_branch
      %974 = sbr.rel (0) target = $region53
    $region52: #{language_and_vision_concat.1} parent=1 // pred_region
      %976 = dma.done [#allocation3], 256
    $region53: #{language_and_vision_concat.1} parent=1 // pred_fallthru
      _
    %977 = vsyncpa [#allocation3], 1

</llo_original>
